<compile_context>
chip_gen: v6e
topology: v6e:2x2x1
jax: 0.10.0
libtpu: 0.0.40
codegen_flags: <defaults>
</compile_context>

<pallas_src>
import math
import functools

import jax
import jax.numpy as jnp
import numpy as np
from jax import lax
from jax.experimental import pallas as pl
from jax.experimental.pallas import tpu as pltpu


# ----------------------------- ALiBi slopes (static) -------------------------

def _get_slopes(n):
    def pow2_slopes(n):
        start = 2 ** (-2 ** (-(math.log2(n) - 3)))
        ratio = start
        return [start * ratio ** i for i in range(n)]
    if math.log2(n).is_integer():
        return pow2_slopes(n)
    closest = 2 ** math.floor(math.log2(n))
    return pow2_slopes(closest) + _get_slopes(2 * closest)[0::2][: n - closest]


# ----------------------------- fused Pallas kernel ---------------------------

def _mha_head_kernel(slopes_ref, q_ref, kv_ref, wq_ref, wk_ref, wv_ref, wo_ref,
                     *rest, q_tile, has_mask, compute_dtype):
    # Grid: (batch, q_tile_idx, head).  Heads are the innermost (reduction) axis; the
    # per-(batch, q-tile) output projection contributions are accumulated in acc_ref.
    if has_mask:
        mask_ref, o_ref, acc_ref = rest
    else:
        mask_ref = None
        o_ref, acc_ref = rest

    qi = pl.program_id(1)   # query-tile index
    h = pl.program_id(2)    # head index

    q_blk = q_ref[0]        # [tq, D]   compute_dtype (bf16)
    kv_blk = kv_ref[0]      # [Lk, D]
    wq = wq_ref[0]          # [D, Dk]
    wk = wk_ref[0]
    wv = wv_ref[0]
    wo = wo_ref[0]          # [Dk, D]

    # Per-head projections: full-depth (K = d_model) bf16 MXU matmuls, f32 accumulation.
    q_h = jnp.dot(q_blk, wq, preferred_element_type=jnp.float32)    # [tq, Dk]
    k_h = jnp.dot(kv_blk, wk, preferred_element_type=jnp.float32)   # [Lk, Dk]
    v_h = jnp.dot(kv_blk, wv, preferred_element_type=jnp.float32)   # [Lk, Dk]

    # logits = q_h @ k_h^T, contracting last dims (no explicit transpose).
    # NOTE: no 1/sqrt(d_kv) scaling on purpose (T5/ByT5 convention, matches module).
    logits = lax.dot_general(
        q_h.astype(compute_dtype), k_h.astype(compute_dtype),
        (((1,), (1,)), ((), ())),
        preferred_element_type=jnp.float32)                          # [tq, Lk] f32

    tq_, lk_ = logits.shape
    # ALiBi relative-position bias, built in-kernel (int32 iota -> exact positions).
    ctx = lax.broadcasted_iota(jnp.int32, (tq_, lk_), 0) + qi * q_tile
    mem = lax.broadcasted_iota(jnp.int32, (tq_, lk_), 1)
    rel_i = ctx - mem
    rel = rel_i.astype(jnp.float32) * jnp.where(
        rel_i > 0, jnp.float32(-0.5), jnp.float32(2.0))
    slope = slopes_ref[h]                      # per-head f32 scalar from SMEM
    logits = logits + slope * rel

    if mask_ref is not None:
        logits = logits + mask_ref[0, 0].astype(jnp.float32)   # head-broadcast mask

    # softmax over keys in f32 (matches .float() in the reference); dropout = identity.
    m = jnp.max(logits, axis=-1, keepdims=True)
    e = jnp.exp(logits - m)
    s = jnp.sum(e, axis=-1, keepdims=True)
    p = e * pl.reciprocal(s, approx=True)      # EUP reciprocal, off the VALU path

    head_out = jnp.dot(p.astype(compute_dtype), v_h.astype(compute_dtype),
                       preferred_element_type=jnp.float32)           # [tq, Dk]
    contrib = jnp.dot(head_out.astype(compute_dtype), wo,
                      preferred_element_type=jnp.float32)            # [tq, D]

    @pl.when(h == 0)
    def _():
        acc_ref[...] = jnp.zeros_like(acc_ref)

    acc_ref[...] += contrib

    @pl.when(h == pl.num_programs(2) - 1)
    def _():
        o_ref[0] = acc_ref[...].astype(o_ref.dtype)


def multi_head_attention(params, kv_sequences, q_sequences, mask=None, *,
                         num_heads, d_kv, q_tile=None, compute_dtype=jnp.bfloat16):
    """ByT5 encoder self-attention (layer_index=0, eval mode, no KV cache)."""
    B, Lk, d_model = kv_sequences.shape
    Bq, Lq, _ = q_sequences.shape
    assert Bq == B
    H, Dk = num_heads, d_kv
    inner = H * Dk
    assert params["WQ"].shape == (d_model, inner)
    assert params["WO"].shape == (inner, d_model)

    tq = Lq if q_tile is None else q_tile
    assert Lq % tq == 0 and (tq == Lq or tq % 8 == 0)
    n_q = Lq // tq

    # Per-head weight layout so the kernel never slices the lane dim:
    #   WQ/WK/WV: [D, H*Dk] -> [H, D, Dk];   WO: [H*Dk, D] -> [H, Dk, D]
    def per_head_in(w):
        return w.reshape(d_model, H, Dk).transpose(1, 0, 2).astype(compute_dtype)

    wq = per_head_in(params["WQ"])
    wk = per_head_in(params["WK"])
    wv = per_head_in(params["WV"])
    wo = params["WO"].reshape(H, Dk, d_model).astype(compute_dtype)

    q_in = q_sequences.astype(compute_dtype)     # bf16 activations -> half the DMA
    kv_in = kv_sequences.astype(compute_dtype)
    slopes = jnp.asarray(_get_slopes(H), dtype=jnp.float32)   # -> SMEM (scalar prefetch)

    has_mask = mask is not None
    in_specs = [
        pl.BlockSpec((1, tq, d_model), lambda b, i, h, sl: (b, i, 0)),   # q tile
        pl.BlockSpec((1, Lk, d_model), lambda b, i, h, sl: (b, 0, 0)),   # kv sequence
        pl.BlockSpec((1, d_model, Dk), lambda b, i, h, sl: (h, 0, 0)),   # WQ[h]
        pl.BlockSpec((1, d_model, Dk), lambda b, i, h, sl: (h, 0, 0)),   # WK[h]
        pl.BlockSpec((1, d_model, Dk), lambda b, i, h, sl: (h, 0, 0)),   # WV[h]
        pl.BlockSpec((1, Dk, d_model), lambda b, i, h, sl: (h, 0, 0)),   # WO[h]
    ]
    args = [q_in, kv_in, wq, wk, wv, wo]

    if has_mask:
        # Keep the mask slim: head-broadcast [B, 1, Lq, Lk] in the compute dtype unless a
        # genuinely per-head mask was supplied.
        m = jnp.asarray(mask, dtype=jnp.float32)
        if m.ndim == 2:
            m = m[None, None]            # [Lq, Lk]    -> [1, 1, Lq, Lk]
        elif m.ndim == 3:
            m = m[:, None]               # [B, Lq, Lk] -> [B, 1, Lq, Lk]
        hm = H if m.shape[1] == H else 1
        m = jnp.broadcast_to(m, (B, hm, Lq, Lk)).astype(compute_dtype)
        if hm == H:
            mask_map = lambda b, i, h, sl: (b, h, i, 0)
        else:
            mask_map = lambda b, i, h, sl: (b, 0, i, 0)
        in_specs.append(pl.BlockSpec((1, 1, tq, Lk), mask_map))
        args.append(m)

    kernel = functools.partial(_mha_head_kernel, q_tile=tq, has_mask=has_mask,
                               compute_dtype=compute_dtype)

    grid_spec = pltpu.PrefetchScalarGridSpec(
        num_scalar_prefetch=1,
        grid=(B, n_q, H),                # heads innermost = accumulation axis
        in_specs=in_specs,
        out_specs=pl.BlockSpec((1, tq, d_model), lambda b, i, h, sl: (b, i, 0)),
        scratch_shapes=[pltpu.VMEM((tq, d_model), jnp.float32)],   # output accumulator
    )

    return pl.pallas_call(
        kernel,
        out_shape=jax.ShapeDtypeStruct((B, Lq, d_model), q_sequences.dtype),
        grid_spec=grid_spec,
        compiler_params=pltpu.CompilerParams(
            dimension_semantics=("parallel", "parallel", "arbitrary"),
            vmem_limit_bytes=32 * 1024 * 1024,   # explicit budget (safe on v5e/v6e/v7x)
        ),
    )(slopes, *args)


# ------------------------------- reference (plain JAX, f32) ------------------

def alibi_bias(q_len, k_len, num_heads):
    ctx = jnp.arange(q_len, dtype=jnp.int32)[:, None]
    mem = jnp.arange(k_len, dtype=jnp.int32)[None, :]
    rel = (ctx - mem).astype(jnp.float32)
    rel = rel * jnp.where((ctx - mem) > 0, jnp.float32(-0.5), jnp.float32(2.0))
    slopes = jnp.asarray(_get_slopes(num_heads), jnp.float32).reshape(num_heads, 1, 1)
    return slopes * rel[None]      # [H, Lq, Lk]


def reference_mha(params, kv_seq, q_seq, mask=None, *, num_heads, d_kv):
    B, Lk, d_model = kv_seq.shape
    _, Lq, _ = q_seq.shape
    H, Dk = num_heads, d_kv
    q = (q_seq @ params["WQ"]).reshape(B, Lq, H, Dk).transpose(0, 2, 1, 3)
    k = (kv_seq @ params["WK"]).reshape(B, Lk, H, Dk).transpose(0, 2, 1, 3)
    v = (kv_seq @ params["WV"]).reshape(B, Lk, H, Dk).transpose(0, 2, 1, 3)
    logits = jnp.einsum("bhqd,bhkd->bhqk", q, k) + alibi_bias(Lq, Lk, H)[None]
    if mask is not None:
        m = jnp.asarray(mask, jnp.float32)
        if m.ndim == 2:
            m = m[None, None]
        elif m.ndim == 3:
            m = m[:, None]
        logits = logits + jnp.broadcast_to(m, (B, H, Lq, Lk))
    p = jax.nn.softmax(logits.astype(jnp.float32), axis=-1)
    o = jnp.einsum("bhqk,bhkd->bhqd", p, v)
    o = o.transpose(0, 2, 1, 3).reshape(B, Lq, H * Dk)
    return o @ params["WO"]


# --------------------------------- main ---------------------------------------

if __name__ == "__main__":
    # small ByT5-ish config
    d_model, num_heads, d_kv = 32, 4, 8
    batch, seq = 2, 8
    inner = num_heads * d_kv

    key = jax.random.PRNGKey(0)
    k0, k1, k2, k3, k4 = jax.random.split(key, 5)

    # weights stored as [d_in, d_out] (i.e. PyTorch W.T), no biases
    params = {
        "WQ": jax.random.normal(k0, (d_model, inner), jnp.float32) * 0.05,
        "WK": jax.random.normal(k1, (d_model, inner), jnp.float32) * 0.05,
        "WV": jax.random.normal(k2, (d_model, inner), jnp.float32) * 0.05,
        "WO": jax.random.normal(k3, (inner, d_model), jnp.float32) * 0.05,
    }
    x = jax.random.normal(k4, (batch, seq, d_model), jnp.float32)

    mha = functools.partial(multi_head_attention, num_heads=num_heads, d_kv=d_kv)

    # encoder self-attention (kv == q == x), no mask
    out = jax.block_until_ready(mha(params, x, x, None))
    ref = reference_mha(params, x, x, None, num_heads=num_heads, d_kv=d_kv)
    # tolerance reflects bf16 MXU operands + approximate EUP reciprocal in the kernel
    np.testing.assert_allclose(np.asarray(out), np.asarray(ref), rtol=3e-2, atol=5e-3)

    # encoder self-attention with an additive key-padding mask ([B, 1, 1, Lk])
    valid = jnp.array([seq, seq - 3])
    key_ok = jnp.arange(seq)[None, :] < valid[:, None]                 # [B, Lk]
    mask = jnp.where(key_ok, 0.0, -1e9).astype(jnp.float32)[:, None, None, :]
    out_m = jax.block_until_ready(mha(params, x, x, mask))
    ref_m = reference_mha(params, x, x, mask, num_heads=num_heads, d_kv=d_kv)
    np.testing.assert_allclose(np.asarray(out_m), np.asarray(ref_m), rtol=3e-2, atol=5e-3)

    # TODO(synk): DECODER_MASKED_ATTENTION / KV-cache incremental-decoding branch not
    # implemented (stateful Python-side cache mutation has no clean Pallas equivalent).
    print("KERNEL_OK")
</pallas_src>

<mosaic_0001>
module attributes {stable_mosaic.version = 11 : i64} {
  func.func @_mha_head_kernel(%arg0: i32, %arg1: i32, %arg2: i32, %arg3: memref<4xf32, #tpu.memory_space<smem>>, %arg4: memref<1x8x32xbf16, #tpu.memory_space<vmem>>, %arg5: memref<1x8x32xbf16, #tpu.memory_space<vmem>>, %arg6: memref<1x32x8xbf16, #tpu.memory_space<vmem>>, %arg7: memref<1x32x8xbf16, #tpu.memory_space<vmem>>, %arg8: memref<1x32x8xbf16, #tpu.memory_space<vmem>>, %arg9: memref<1x8x32xbf16, #tpu.memory_space<vmem>>, %arg10: memref<1x8x32xf32, #tpu.memory_space<vmem>>, %arg11: memref<8x32xf32, #tpu.memory_space<vmem>>) attributes {dimension_semantics = [#tpu.dimension_semantics<parallel>, #tpu.dimension_semantics<parallel>, #tpu.dimension_semantics<arbitrary>], iteration_bounds = array<i64: 2, 1, 4>, scalar_prefetch = 1 : i64, scratch_operands = 1 : i64, tpu.core_type = #tpu.core_type<tc>, window_params = [{transform_indices = @transform_0, window_bounds = array<i64: 1, 8, 32>}, {transform_indices = @transform_1, window_bounds = array<i64: 1, 8, 32>}, {transform_indices = @transform_2, window_bounds = array<i64: 1, 32, 8>}, {transform_indices = @transform_3, window_bounds = array<i64: 1, 32, 8>}, {transform_indices = @transform_4, window_bounds = array<i64: 1, 32, 8>}, {transform_indices = @transform_5, window_bounds = array<i64: 1, 8, 32>}, {transform_indices = @transform_6, window_bounds = array<i64: 1, 8, 32>}]} {
    %c0 = arith.constant 0 : index
    %c0_0 = arith.constant 0 : index
    %c0_1 = arith.constant 0 : index
    %0 = vector.load %arg4[%c0, %c0_0, %c0_1] : memref<1x8x32xbf16, #tpu.memory_space<vmem>>, vector<1x8x32xbf16>
    %1 = vector.shape_cast %0 : vector<1x8x32xbf16> to vector<8x32xbf16>
    %c0_2 = arith.constant 0 : index
    %c0_3 = arith.constant 0 : index
    %c0_4 = arith.constant 0 : index
    %2 = vector.load %arg5[%c0_2, %c0_3, %c0_4] : memref<1x8x32xbf16, #tpu.memory_space<vmem>>, vector<1x8x32xbf16>
    %3 = vector.shape_cast %2 : vector<1x8x32xbf16> to vector<8x32xbf16>
    %c0_5 = arith.constant 0 : index
    %c0_6 = arith.constant 0 : index
    %c0_7 = arith.constant 0 : index
    %4 = vector.load %arg6[%c0_5, %c0_6, %c0_7] : memref<1x32x8xbf16, #tpu.memory_space<vmem>>, vector<1x32x8xbf16>
    %5 = vector.shape_cast %4 : vector<1x32x8xbf16> to vector<32x8xbf16>
    %c0_8 = arith.constant 0 : index
    %c0_9 = arith.constant 0 : index
    %c0_10 = arith.constant 0 : index
    %6 = vector.load %arg7[%c0_8, %c0_9, %c0_10] : memref<1x32x8xbf16, #tpu.memory_space<vmem>>, vector<1x32x8xbf16>
    %7 = vector.shape_cast %6 : vector<1x32x8xbf16> to vector<32x8xbf16>
    %c0_11 = arith.constant 0 : index
    %c0_12 = arith.constant 0 : index
    %c0_13 = arith.constant 0 : index
    %8 = vector.load %arg8[%c0_11, %c0_12, %c0_13] : memref<1x32x8xbf16, #tpu.memory_space<vmem>>, vector<1x32x8xbf16>
    %9 = vector.shape_cast %8 : vector<1x32x8xbf16> to vector<32x8xbf16>
    %c0_14 = arith.constant 0 : index
    %c0_15 = arith.constant 0 : index
    %c0_16 = arith.constant 0 : index
    %10 = vector.load %arg9[%c0_14, %c0_15, %c0_16] : memref<1x8x32xbf16, #tpu.memory_space<vmem>>, vector<1x8x32xbf16>
    %11 = vector.shape_cast %10 : vector<1x8x32xbf16> to vector<8x32xbf16>
    %cst = arith.constant dense<0.000000e+00> : vector<8x8xf32>
    %12 = tpu.matmul %1, %5, %cst {dimension_numbers = #tpu.dot_dimension_numbers<[1], [0], [0], [1], [0, 0, 1, 1], [], []>} : vector<8x32xbf16>, vector<32x8xbf16>, vector<8x8xf32> -> vector<8x8xf32>
    %cst_17 = arith.constant dense<0.000000e+00> : vector<8x8xf32>
    %13 = tpu.matmul %3, %7, %cst_17 {dimension_numbers = #tpu.dot_dimension_numbers<[1], [0], [0], [1], [0, 0, 1, 1], [], []>} : vector<8x32xbf16>, vector<32x8xbf16>, vector<8x8xf32> -> vector<8x8xf32>
    %cst_18 = arith.constant dense<0.000000e+00> : vector<8x8xf32>
    %14 = tpu.matmul %3, %9, %cst_18 {dimension_numbers = #tpu.dot_dimension_numbers<[1], [0], [0], [1], [0, 0, 1, 1], [], []>} : vector<8x32xbf16>, vector<32x8xbf16>, vector<8x8xf32> -> vector<8x8xf32>
    %15 = arith.truncf %12 : vector<8x8xf32> to vector<8x8xbf16>
    %16 = arith.truncf %13 : vector<8x8xf32> to vector<8x8xbf16>
    %cst_19 = arith.constant dense<0.000000e+00> : vector<8x8xf32>
    %17 = tpu.matmul %15, %16, %cst_19 {dimension_numbers = #tpu.dot_dimension_numbers<[1], [1], [0], [0], [0, 0, 1, 0], [], []>} : vector<8x8xbf16>, vector<8x8xbf16>, vector<8x8xf32> -> vector<8x8xf32>
    %18 = tpu.iota {dimensions = array<i32: 0>} : vector<8x8xi32>
    %c8_i32 = arith.constant 8 : i32
    %19 = arith.muli %arg1, %c8_i32 : i32
    %20 = vector.broadcast %19 : i32 to vector<8x8xi32>
    %21 = arith.addi %18, %20 : vector<8x8xi32>
    %22 = tpu.iota {dimensions = array<i32: 1>} : vector<8x8xi32>
    %23 = arith.subi %21, %22 : vector<8x8xi32>
    %24 = arith.sitofp %23 : vector<8x8xi32> to vector<8x8xf32>
    %c0_i32 = arith.constant 0 : i32
    %25 = vector.broadcast %c0_i32 : i32 to vector<8x8xi32>
    %26 = arith.cmpi sgt, %23, %25 : vector<8x8xi32>
    %cst_20 = arith.constant -5.000000e-01 : f32
    %cst_21 = arith.constant 2.000000e+00 : f32
    %27 = vector.broadcast %cst_20 : f32 to vector<8x8xf32>
    %28 = vector.broadcast %cst_21 : f32 to vector<8x8xf32>
    %29 = arith.select %26, %27, %28 : vector<8x8xi1>, vector<8x8xf32>
    %30 = arith.mulf %24, %29 : vector<8x8xf32>
    %31 = arith.index_cast %arg2 : i32 to index
    %32 = memref.load %arg3[%31] : memref<4xf32, #tpu.memory_space<smem>>
    %33 = vector.broadcast %32 : f32 to vector<8x8xf32>
    %34 = arith.mulf %33, %30 : vector<8x8xf32>
    %35 = arith.addf %17, %34 : vector<8x8xf32>
    %cst_22 = arith.constant dense<0xFF800000> : vector<8xf32>
    %36 = vector.multi_reduction <maximumf>, %35, %cst_22 [1] : vector<8x8xf32> to vector<8xf32>
    %37 = vector.shape_cast %36 : vector<8xf32> to vector<8x1xf32>
    %38 = vector.broadcast %37 : vector<8x1xf32> to vector<8x8xf32>
    %39 = arith.subf %35, %38 : vector<8x8xf32>
    %40 = math.exp %39 : vector<8x8xf32>
    %cst_23 = arith.constant dense<0.000000e+00> : vector<8xf32>
    %41 = vector.multi_reduction <add>, %40, %cst_23 [1] : vector<8x8xf32> to vector<8xf32>
    %42 = vector.shape_cast %41 : vector<8xf32> to vector<8x1xf32>
    %43 = tpu.reciprocal %42 {approx = true} : vector<8x1xf32> -> vector<8x1xf32>
    %44 = vector.broadcast %43 : vector<8x1xf32> to vector<8x8xf32>
    %45 = arith.mulf %40, %44 : vector<8x8xf32>
    %46 = arith.truncf %45 : vector<8x8xf32> to vector<8x8xbf16>
    %47 = arith.truncf %14 : vector<8x8xf32> to vector<8x8xbf16>
    %cst_24 = arith.constant dense<0.000000e+00> : vector<8x8xf32>
    %48 = tpu.matmul %46, %47, %cst_24 {dimension_numbers = #tpu.dot_dimension_numbers<[1], [0], [0], [1], [0, 0, 1, 1], [], []>} : vector<8x8xbf16>, vector<8x8xbf16>, vector<8x8xf32> -> vector<8x8xf32>
    %49 = arith.truncf %48 : vector<8x8xf32> to vector<8x8xbf16>
    %cst_25 = arith.constant dense<0.000000e+00> : vector<8x32xf32>
    %50 = tpu.matmul %49, %11, %cst_25 {dimension_numbers = #tpu.dot_dimension_numbers<[1], [0], [0], [1], [0, 0, 1, 1], [], []>} : vector<8x8xbf16>, vector<8x32xbf16>, vector<8x32xf32> -> vector<8x32xf32>
    %c0_i32_26 = arith.constant 0 : i32
    %51 = arith.cmpi eq, %arg2, %c0_i32_26 : i32
    %52 = arith.extui %51 : i1 to i32
    %c0_i32_27 = arith.constant 0 : i32
    %53 = arith.cmpi ne, %52, %c0_i32_27 : i32
    scf.if %53 {
      %cst_33 = arith.constant 0.000000e+00 : f32
      %60 = vector.broadcast %cst_33 : f32 to vector<8x32xf32>
      %c0_34 = arith.constant 0 : index
      %c0_35 = arith.constant 0 : index
      %61 = vector.load %arg11[%c0_34, %c0_35] : memref<8x32xf32, #tpu.memory_space<vmem>>, vector<8x32xf32>
      tpu.vector_store %arg11[%c0_34, %c0_35], %60 {strides = array<i32>} : memref<8x32xf32, #tpu.memory_space<vmem>>, vector<8x32xf32>,
    } else {
    }
    %c0_28 = arith.constant 0 : index
    %c0_29 = arith.constant 0 : index
    %54 = vector.load %arg11[%c0_28, %c0_29] : memref<8x32xf32, #tpu.memory_space<vmem>>, vector<8x32xf32>
    %55 = arith.addf %54, %50 : vector<8x32xf32>
    %c0_30 = arith.constant 0 : index
    %c0_31 = arith.constant 0 : index
    %56 = vector.load %arg11[%c0_30, %c0_31] : memref<8x32xf32, #tpu.memory_space<vmem>>, vector<8x32xf32>
    tpu.vector_store %arg11[%c0_30, %c0_31], %55 {strides = array<i32>} : memref<8x32xf32, #tpu.memory_space<vmem>>, vector<8x32xf32>,
    %c3_i32 = arith.constant 3 : i32
    %57 = arith.cmpi eq, %arg2, %c3_i32 : i32
    %58 = arith.extui %57 : i1 to i32
    %c0_i32_32 = arith.constant 0 : i32
    %59 = arith.cmpi ne, %58, %c0_i32_32 : i32
    scf.if %59 {
      %c0_33 = arith.constant 0 : index
      %c0_34 = arith.constant 0 : index
      %60 = vector.load %arg11[%c0_33, %c0_34] : memref<8x32xf32, #tpu.memory_space<vmem>>, vector<8x32xf32>
      %c0_35 = arith.constant 0 : index
      %c0_36 = arith.constant 0 : index
      %c0_37 = arith.constant 0 : index
      %61 = vector.load %arg10[%c0_35, %c0_36, %c0_37] : memref<1x8x32xf32, #tpu.memory_space<vmem>>, vector<1x8x32xf32>
      %62 = vector.shape_cast %61 : vector<1x8x32xf32> to vector<8x32xf32>
      %63 = vector.shape_cast %60 : vector<8x32xf32> to vector<1x8x32xf32>
      tpu.vector_store %arg10[%c0_35, %c0_36, %c0_37], %63 {strides = array<i32>} : memref<1x8x32xf32, #tpu.memory_space<vmem>>, vector<1x8x32xf32>,
    } else {
    }
    return
  }
  func.func @transform_0(%arg0: i32, %arg1: i32, %arg2: i32, %arg3: memref<4xf32, #tpu.memory_space<smem>>) -> (i32, i32, i32) {
    %c0_i32 = arith.constant 0 : i32
    %c0_i32_0 = arith.constant 0 : i32
    return %arg0, %arg1, %c0_i32 : i32, i32, i32
  }
  func.func @transform_1(%arg0: i32, %arg1: i32, %arg2: i32, %arg3: memref<4xf32, #tpu.memory_space<smem>>) -> (i32, i32, i32) {
    %c0_i32 = arith.constant 0 : i32
    %c0_i32_0 = arith.constant 0 : i32
    %c0_i32_1 = arith.constant 0 : i32
    return %arg0, %c0_i32, %c0_i32_0 : i32, i32, i32
  }
  func.func @transform_2(%arg0: i32, %arg1: i32, %arg2: i32, %arg3: memref<4xf32, #tpu.memory_space<smem>>) -> (i32, i32, i32) {
    %c0_i32 = arith.constant 0 : i32
    %c0_i32_0 = arith.constant 0 : i32
    %c0_i32_1 = arith.constant 0 : i32
    return %arg2, %c0_i32, %c0_i32_0 : i32, i32, i32
  }
  func.func @transform_3(%arg0: i32, %arg1: i32, %arg2: i32, %arg3: memref<4xf32, #tpu.memory_space<smem>>) -> (i32, i32, i32) {
    %c0_i32 = arith.constant 0 : i32
    %c0_i32_0 = arith.constant 0 : i32
    %c0_i32_1 = arith.constant 0 : i32
    return %arg2, %c0_i32, %c0_i32_0 : i32, i32, i32
  }
  func.func @transform_4(%arg0: i32, %arg1: i32, %arg2: i32, %arg3: memref<4xf32, #tpu.memory_space<smem>>) -> (i32, i32, i32) {
    %c0_i32 = arith.constant 0 : i32
    %c0_i32_0 = arith.constant 0 : i32
    %c0_i32_1 = arith.constant 0 : i32
    return %arg2, %c0_i32, %c0_i32_0 : i32, i32, i32
  }
  func.func @transform_5(%arg0: i32, %arg1: i32, %arg2: i32, %arg3: memref<4xf32, #tpu.memory_space<smem>>) -> (i32, i32, i32) {
    %c0_i32 = arith.constant 0 : i32
    %c0_i32_0 = arith.constant 0 : i32
    %c0_i32_1 = arith.constant 0 : i32
    return %arg2, %c0_i32, %c0_i32_0 : i32, i32, i32
  }
  func.func @transform_6(%arg0: i32, %arg1: i32, %arg2: i32, %arg3: memref<4xf32, #tpu.memory_space<smem>>) -> (i32, i32, i32) {
    %c0_i32 = arith.constant 0 : i32
    %c0_i32_0 = arith.constant 0 : i32
    return %arg0, %arg1, %c0_i32 : i32, i32, i32
  }
}

</mosaic_0001>

<llo_original>
// kernel: tpu_custom_call.1
$region0: #{tpu_custom_call.1}
  #allocation0 [shape = 'u32[]', space=smem, size = 0x4, offset = 0x4, fixed_abs, tag = 'smem constant byte address 0x4 - core index']
  #allocation1 [shape = 'u32[144,128]{1,0:T(1,128)}', space=vmem, size = 0x12000, scoped, tag = 'internal scratch']
  #allocation2 [shape = 'f32[8,32]{1,0:T(8,128)}', space=vmem, size = 0x1000, scoped, tag = 'scratch operand']
  #allocation3 [shape = 's32[1]{0}', space=sflag, size = 0x4, scoped, tag = 'scoped memory for tpu_custom_call.1']
  #allocation4 [shape = 'u8[512]{0}', space=smem, size = 0x200, scoped, tag = 'prefetched SMEM operand 0']
  %s0 = inlined_call_operand.vmem [shape: f32[4], index: 0, kind: input, shape index: {}]
  %s1 = inlined_call_operand.vmem [shape: bf16[2,8,32], index: 1, kind: input, shape index: {}]
  %s2 = inlined_call_operand.vmem [shape: bf16[2,8,32], index: 2, kind: input, shape index: {}]
  %s3 = inlined_call_operand.vmem [shape: bf16[4,32,8], index: 3, kind: input, shape index: {}]
  %s4 = inlined_call_operand.vmem [shape: bf16[4,32,8], index: 4, kind: input, shape index: {}]
  %s5 = inlined_call_operand.vmem [shape: bf16[4,32,8], index: 5, kind: input, shape index: {}]
  %s6 = inlined_call_operand.vmem [shape: bf16[4,8,32], index: 6, kind: input, shape index: {}]
  %s7 = inlined_call_operand.hbm [shape: f32[2,8,32], index: 7, kind: output, shape index: {}]
  %s8 = sld [smem:[#allocation0]]
  $region65: #{tpu_custom_call.1} parent=0
    _
  %s10 = ssub.s32 1, %s8
  %s11 = scalar_select 0, %s10, %s8
  %s12 = sshll.u32 %s0, 4
  %s13 = int_to_ptr.vmem [resolvable:$true] %s12
  %15 = dma.vmem_to_smem %s13, 16, [#allocation4], [#allocation3]
  %16 = dma.done [#allocation3], 16
  %17 = sfence
  $region1: #{tpu_custom_call.1} parent=0
    #allocation5 [shape = 'u8[8192]{0}', space=vmem, size = 0x2000, scoped, tag = 'output window, operand 0']
    #allocation6 [shape = 's32[2]{0}', space=sflag, size = 0x8, scoped, tag = 'scoped memory for tpu_custom_call.1']
    %18 = vsyncpa [#allocation6], 0
    %s19 = scalar_lea.sflag [#allocation6], 1
    %20 = vsyncpa %s19, 0
    loop: start=0, step=1, limit=10
    $region2: #{tpu_custom_call.1} parent=1 // loop_pre_header
      _
    $region3: #{tpu_custom_call.1} parent=1 // loop_header
      %s22 = sphi 0, %s26
      %p23 = scmp.ge.s32.totalorder %s22, 10
      %s29 = sphi 0, %s48
      %s30 = sphi 0, %s44
      %s31 = sphi 0, %s40
      %s32 = sphi 0, %s29
      %s33 = sphi 0, %s30
      %s34 = sphi 0, %s31
      %s35 = sphi 0, %s32
      %s36 = sphi 0, %s33
      %s37 = sphi 0, %s34
      %s53 = sphi 0, %s55
      %s56 = sphi 0, %s53
      %s57 = sphi 0, %s56
      %s73 = sphi 0, %s57
      %s79 = sphi 0, %s81
      %s82 = sphi 0, %s79
      %s83 = sphi 0, %s82
      %s99 = sphi 0, %s83
      %s105 = sphi 0, %s107
      %s108 = sphi 0, %s105
      %s109 = sphi 0, %s108
      %s125 = sphi 0, %s109
      %s131 = sphi 0, %s133
      %s134 = sphi 0, %s131
      %s135 = sphi 0, %s134
      %s151 = sphi 0, %s135
      %s157 = sphi 0, %s159
      %s160 = sphi 0, %s157
      %s161 = sphi 0, %s160
      %s177 = sphi 0, %s161
      %s183 = sphi 0, %s185
      %s186 = sphi 0, %s183
      %s187 = sphi 0, %s186
      %s203 = sphi 0, %s187
      %s211 = sphi 0, %s213
      %s214 = sphi 0, %s211
      %s215 = sphi 0, %s214
      %s231 = sphi 0, %s215
    $region4: #{tpu_custom_call.1} parent=1 // loop_header_branch
      %25 = sbr.rel (%p23) target = $region8
    $region5: #{tpu_custom_call.1} parent=1 // loop_body
      %s27 = ssub.s32 %s22, 1
      %s28 = ssub.s32 %s22, 2
      %s38 = sadd.s32 1, %s31
      %p39 = scmp.ge.s32.totalorder %s38, 4
      %s40 = scalar_select %p39, 0, %s38
      %s41 = sadd.s32 1, %s30
      %s42 = scalar_select %p39, %s41, %s30
      %p43 = scmp.ge.s32.totalorder %s42, 1
      %s44 = scalar_select %p43, 0, %s42
      %s45 = sadd.s32 1, %s29
      %s46 = scalar_select %p43, %s45, %s29
      %p47 = scmp.ge.s32.totalorder %s46, 2
      %s48 = scalar_select %p47, 0, %s46
      %s49 = ssub.s32 %s29, %s48
      %s50 = ssub.s32 %s30, %s44
      %s51 = sor.u32 %s49, %s50
      %p52 = scmp.eq.s32.totalorder %s51, 0
      %s54 = sadd.s32 %s53, 1
      %s55 = scalar_select %p52, %s53, %s54
      %p58 = pneg %p52
      %p59 = scmp.eq.s32.totalorder %s22, 7
      %p60 = por %p58, %p59
      %p61 = scmp.ne.s32.totalorder %s53, %s56
      %p62 = scmp.eq.s32.totalorder %s22, 0
      %p63 = por %p61, %p62
      %p64 = scmp.ne.s32.totalorder %s53, %s56
      %p65 = scmp.eq.s32.totalorder %s27, 7
      %p66 = por %p64, %p65
      %p67 = scmp.ne.s32.totalorder %s56, %s57
      %p68 = scmp.eq.s32.totalorder %s27, 0
      %p69 = por %p67, %p68
      %p70 = scmp.ne.s32.totalorder %s56, %s57
      %p71 = scmp.eq.s32.totalorder %s28, 7
      %p72 = por %p70, %p71
      %p74 = scmp.ne.s32.totalorder %s57, %s73
      %p75 = scmp.eq.s32.totalorder %s28, 0
      %p76 = por %p74, %p75
      %s77 = ssub.s32 %s29, %s48
      %p78 = scmp.eq.s32.totalorder %s77, 0
      %s80 = sadd.s32 %s79, 1
      %s81 = scalar_select %p78, %s79, %s80
      %p84 = pneg %p78
      %p85 = scmp.eq.s32.totalorder %s22, 7
      %p86 = por %p84, %p85
      %p87 = scmp.ne.s32.totalorder %s79, %s82
      %p88 = scmp.eq.s32.totalorder %s22, 0
      %p89 = por %p87, %p88
      %p90 = scmp.ne.s32.totalorder %s79, %s82
      %p91 = scmp.eq.s32.totalorder %s27, 7
      %p92 = por %p90, %p91
      %p93 = scmp.ne.s32.totalorder %s82, %s83
      %p94 = scmp.eq.s32.totalorder %s27, 0
      %p95 = por %p93, %p94
      %p96 = scmp.ne.s32.totalorder %s82, %s83
      %p97 = scmp.eq.s32.totalorder %s28, 7
      %p98 = por %p96, %p97
      %p100 = scmp.ne.s32.totalorder %s83, %s99
      %p101 = scmp.eq.s32.totalorder %s28, 0
      %p102 = por %p100, %p101
      %s103 = ssub.s32 %s31, %s40
      %p104 = scmp.eq.s32.totalorder %s103, 0
      %s106 = sadd.s32 %s105, 1
      %s107 = scalar_select %p104, %s105, %s106
      %p110 = pneg %p104
      %p111 = scmp.eq.s32.totalorder %s22, 7
      %p112 = por %p110, %p111
      %p113 = scmp.ne.s32.totalorder %s105, %s108
      %p114 = scmp.eq.s32.totalorder %s22, 0
      %p115 = por %p113, %p114
      %p116 = scmp.ne.s32.totalorder %s105, %s108
      %p117 = scmp.eq.s32.totalorder %s27, 7
      %p118 = por %p116, %p117
      %p119 = scmp.ne.s32.totalorder %s108, %s109
      %p120 = scmp.eq.s32.totalorder %s27, 0
      %p121 = por %p119, %p120
      %p122 = scmp.ne.s32.totalorder %s108, %s109
      %p123 = scmp.eq.s32.totalorder %s28, 7
      %p124 = por %p122, %p123
      %p126 = scmp.ne.s32.totalorder %s109, %s125
      %p127 = scmp.eq.s32.totalorder %s28, 0
      %p128 = por %p126, %p127
      %s129 = ssub.s32 %s31, %s40
      %p130 = scmp.eq.s32.totalorder %s129, 0
      %s132 = sadd.s32 %s131, 1
      %s133 = scalar_select %p130, %s131, %s132
      %p136 = pneg %p130
      %p137 = scmp.eq.s32.totalorder %s22, 7
      %p138 = por %p136, %p137
      %p139 = scmp.ne.s32.totalorder %s131, %s134
      %p140 = scmp.eq.s32.totalorder %s22, 0
      %p141 = por %p139, %p140
      %p142 = scmp.ne.s32.totalorder %s131, %s134
      %p143 = scmp.eq.s32.totalorder %s27, 7
      %p144 = por %p142, %p143
      %p145 = scmp.ne.s32.totalorder %s134, %s135
      %p146 = scmp.eq.s32.totalorder %s27, 0
      %p147 = por %p145, %p146
      %p148 = scmp.ne.s32.totalorder %s134, %s135
      %p149 = scmp.eq.s32.totalorder %s28, 7
      %p150 = por %p148, %p149
      %p152 = scmp.ne.s32.totalorder %s135, %s151
      %p153 = scmp.eq.s32.totalorder %s28, 0
      %p154 = por %p152, %p153
      %s155 = ssub.s32 %s31, %s40
      %p156 = scmp.eq.s32.totalorder %s155, 0
      %s158 = sadd.s32 %s157, 1
      %s159 = scalar_select %p156, %s157, %s158
      %p162 = pneg %p156
      %p163 = scmp.eq.s32.totalorder %s22, 7
      %p164 = por %p162, %p163
      %p165 = scmp.ne.s32.totalorder %s157, %s160
      %p166 = scmp.eq.s32.totalorder %s22, 0
      %p167 = por %p165, %p166
      %p168 = scmp.ne.s32.totalorder %s157, %s160
      %p169 = scmp.eq.s32.totalorder %s27, 7
      %p170 = por %p168, %p169
      %p171 = scmp.ne.s32.totalorder %s160, %s161
      %p172 = scmp.eq.s32.totalorder %s27, 0
      %p173 = por %p171, %p172
      %p174 = scmp.ne.s32.totalorder %s160, %s161
      %p175 = scmp.eq.s32.totalorder %s28, 7
      %p176 = por %p174, %p175
      %p178 = scmp.ne.s32.totalorder %s161, %s177
      %p179 = scmp.eq.s32.totalorder %s28, 0
      %p180 = por %p178, %p179
      %s181 = ssub.s32 %s31, %s40
      %p182 = scmp.eq.s32.totalorder %s181, 0
      %s184 = sadd.s32 %s183, 1
      %s185 = scalar_select %p182, %s183, %s184
      %p188 = pneg %p182
      %p189 = scmp.eq.s32.totalorder %s22, 7
      %p190 = por %p188, %p189
      %p191 = scmp.ne.s32.totalorder %s183, %s186
      %p192 = scmp.eq.s32.totalorder %s22, 0
      %p193 = por %p191, %p192
      %p194 = scmp.ne.s32.totalorder %s183, %s186
      %p195 = scmp.eq.s32.totalorder %s27, 7
      %p196 = por %p194, %p195
      %p197 = scmp.ne.s32.totalorder %s186, %s187
      %p198 = scmp.eq.s32.totalorder %s27, 0
      %p199 = por %p197, %p198
      %p200 = scmp.ne.s32.totalorder %s186, %s187
      %p201 = scmp.eq.s32.totalorder %s28, 7
      %p202 = por %p200, %p201
      %p204 = scmp.ne.s32.totalorder %s187, %s203
      %p205 = scmp.eq.s32.totalorder %s28, 0
      %p206 = por %p204, %p205
      %s207 = ssub.s32 %s29, %s48
      %s208 = ssub.s32 %s30, %s44
      %s209 = sor.u32 %s207, %s208
      %p210 = scmp.eq.s32.totalorder %s209, 0
      %s212 = sadd.s32 %s211, 1
      %s213 = scalar_select %p210, %s211, %s212
      %p216 = pneg %p210
      %p217 = scmp.eq.s32.totalorder %s22, 7
      %p218 = por %p216, %p217
      %p219 = scmp.ne.s32.totalorder %s211, %s214
      %p220 = scmp.eq.s32.totalorder %s22, 0
      %p221 = por %p219, %p220
      %p222 = scmp.ne.s32.totalorder %s211, %s214
      %p223 = scmp.eq.s32.totalorder %s27, 7
      %p224 = por %p222, %p223
      %p225 = scmp.ne.s32.totalorder %s214, %s215
      %p226 = scmp.eq.s32.totalorder %s27, 0
      %p227 = por %p225, %p226
      %p228 = scmp.ne.s32.totalorder %s214, %s215
      %p229 = scmp.eq.s32.totalorder %s28, 7
      %p230 = por %p228, %p229
      %p232 = scmp.ne.s32.totalorder %s215, %s231
      %p233 = scmp.eq.s32.totalorder %s28, 0
      %p234 = por %p232, %p233
      %p235 = scmp.le.s32.totalorder 1, %s22
      %p236 = scmp.lt.s32.totalorder %s22, 9
      %p237 = pnand %p235, %p236
      %p238 = pneg %p237
      // Predicated region
      $region9: #{tpu_custom_call.1} parent=5 // pred_check
        _
      $region10: #{tpu_custom_call.1} parent=5 // pred_check_branch
        %240 = sbr.rel (%p237) target = $region12
      $region11: #{tpu_custom_call.1} parent=5 // pred_region
        %s241 = ssub.s32 %s22, 1
      $region12: #{tpu_custom_call.1} parent=5 // pred_fallthru
        _
      %p242 = scmp.lt.s32.totalorder %s22, 8
      // Predicated region
      $region13: #{tpu_custom_call.1} parent=5 // pred_check
        %p243 = pneg %p242
      $region14: #{tpu_custom_call.1} parent=5 // pred_check_branch
        %245 = sbr.rel (%p243) target = $region16
      $region15: #{tpu_custom_call.1} parent=5 // pred_region
        // Predicated region
        $region17: #{tpu_custom_call.1} parent=15 // pred_check
          %p246 = pneg %p63
        $region18: #{tpu_custom_call.1} parent=15 // pred_check_branch
          %248 = sbr.rel (%p246) target = $region20
        $region19: #{tpu_custom_call.1} parent=15 // pred_region
          %p249 = scmp.lt.s32.totalorder %s29, 1
          %s250 = scalar_select %p249, %s29, 1
          %p251 = scmp.lt.s32.totalorder %s30, 0
          %s252 = scalar_select %p251, %s30, 0
          %s253 = sadd.s32 %s252, %s250
          %s254 = smul.addr %s253, 4
          %s255 = scalar_lea.vmem %s1, %s254
        $region20: #{tpu_custom_call.1} parent=15 // pred_fallthru
          _
        // Predicated region
        $region21: #{tpu_custom_call.1} parent=15 // pred_check
          %p256 = pneg %p89
        $region22: #{tpu_custom_call.1} parent=15 // pred_check_branch
          %258 = sbr.rel (%p256) target = $region24
        $region23: #{tpu_custom_call.1} parent=15 // pred_region
          %p259 = scmp.lt.s32.totalorder %s29, 1
          %s260 = scalar_select %p259, %s29, 1
          %s261 = smul.addr %s260, 4
          %s262 = scalar_lea.vmem %s2, %s261
        $region24: #{tpu_custom_call.1} parent=15 // pred_fallthru
          _
        // Predicated region
        $region25: #{tpu_custom_call.1} parent=15 // pred_check
          %p263 = pneg %p115
        $region26: #{tpu_custom_call.1} parent=15 // pred_check_branch
          %265 = sbr.rel (%p263) target = $region28
        $region27: #{tpu_custom_call.1} parent=15 // pred_region
          %p266 = scmp.lt.s32.totalorder %s31, 3
          %s267 = scalar_select %p266, %s31, 3
          %s268 = smul.addr %s267, 4
          %s269 = smul.addr %s268, 4
          %s270 = scalar_lea.vmem %s3, %s269
        $region28: #{tpu_custom_call.1} parent=15 // pred_fallthru
          _
        // Predicated region
        $region29: #{tpu_custom_call.1} parent=15 // pred_check
          %p271 = pneg %p141
        $region30: #{tpu_custom_call.1} parent=15 // pred_check_branch
          %273 = sbr.rel (%p271) target = $region32
        $region31: #{tpu_custom_call.1} parent=15 // pred_region
          %p274 = scmp.lt.s32.totalorder %s31, 3
          %s275 = scalar_select %p274, %s31, 3
          %s276 = smul.addr %s275, 4
          %s277 = smul.addr %s276, 4
          %s278 = scalar_lea.vmem %s4, %s277
        $region32: #{tpu_custom_call.1} parent=15 // pred_fallthru
          _
        // Predicated region
        $region33: #{tpu_custom_call.1} parent=15 // pred_check
          %p279 = pneg %p167
        $region34: #{tpu_custom_call.1} parent=15 // pred_check_branch
          %281 = sbr.rel (%p279) target = $region36
        $region35: #{tpu_custom_call.1} parent=15 // pred_region
          %p282 = scmp.lt.s32.totalorder %s31, 3
          %s283 = scalar_select %p282, %s31, 3
          %s284 = smul.addr %s283, 4
          %s285 = smul.addr %s284, 4
          %s286 = scalar_lea.vmem %s5, %s285
        $region36: #{tpu_custom_call.1} parent=15 // pred_fallthru
          _
        // Predicated region
        $region37: #{tpu_custom_call.1} parent=15 // pred_check
          %p287 = pneg %p193
        $region38: #{tpu_custom_call.1} parent=15 // pred_check_branch
          %289 = sbr.rel (%p287) target = $region40
        $region39: #{tpu_custom_call.1} parent=15 // pred_region
          %p290 = scmp.lt.s32.totalorder %s31, 3
          %s291 = scalar_select %p290, %s31, 3
          %s292 = smul.addr %s291, 4
          %s293 = scalar_lea.vmem %s6, %s292
        $region40: #{tpu_custom_call.1} parent=15 // pred_fallthru
          _
      $region16: #{tpu_custom_call.1} parent=5 // pred_fallthru
        _
      %p294 = scmp.le.s32.totalorder 1, %s22
      %p295 = scmp.lt.s32.totalorder %s22, 9
      %p296 = pnand %p294, %p295
      %p297 = pneg %p296
      // Predicated region
      $region41: #{tpu_custom_call.1} parent=5 // pred_check
        _
      $region42: #{tpu_custom_call.1} parent=5 // pred_check_branch
        %299 = sbr.rel (%p296) target = $region44
      $region43: #{tpu_custom_call.1} parent=5 // pred_region
        %s300 = ssub.s32 %s22, 1
        %p301 = scmp.lt.s32.totalorder %s32, 1
        %s302 = scalar_select %p301, %s32, 1
        %p303 = scmp.lt.s32.totalorder %s33, 0
        %s304 = scalar_select %p303, %s33, 0
        %s305 = sadd.s32 %s304, %s302
        %s306 = smul.addr %s305, 4
        %s307 = scalar_lea.vmem %s1, %s306
        %p308 = pneg %p69
        %p309 = pneg %p66
        %p310 = scmp.lt.s32.totalorder %s32, 1
        %s311 = scalar_select %p310, %s32, 1
        %s312 = smul.addr %s311, 4
        %s313 = scalar_lea.vmem %s2, %s312
        %p314 = pneg %p95
        %p315 = pneg %p92
        %p316 = scmp.lt.s32.totalorder %s34, 3
        %s317 = scalar_select %p316, %s34, 3
        %s318 = smul.addr %s317, 4
        %s319 = smul.addr %s318, 4
        %s320 = scalar_lea.vmem %s3, %s319
        %p321 = pneg %p121
        %p322 = pneg %p118
        %p323 = scmp.lt.s32.totalorder %s34, 3
        %s324 = scalar_select %p323, %s34, 3
        %s325 = smul.addr %s324, 4
        %s326 = smul.addr %s325, 4
        %s327 = scalar_lea.vmem %s4, %s326
        %p328 = pneg %p147
        %p329 = pneg %p144
        %p330 = scmp.lt.s32.totalorder %s34, 3
        %s331 = scalar_select %p330, %s34, 3
        %s332 = smul.addr %s331, 4
        %s333 = smul.addr %s332, 4
        %s334 = scalar_lea.vmem %s5, %s333
        %p335 = pneg %p173
        %p336 = pneg %p170
        %p337 = scmp.lt.s32.totalorder %s34, 3
        %s338 = scalar_select %p337, %s34, 3
        %s339 = smul.addr %s338, 4
        %s340 = scalar_lea.vmem %s6, %s339
        %p341 = pneg %p199
        %p342 = pneg %p196
        %p343 = pneg %p227
        %p344 = pneg %p224
        %s345 = sand.u32 %s214, 1
        %s346 = scalar_lea.sflag [#allocation6], %s345
        %s347 = sand.u32 %s214, 1
        %s348 = smul.addr %s347, 8
        %s349 = scalar_lea.vmem [#allocation5], %s348
        %p350 = scmp.lt.s32.totalorder %s32, 1
        %s351 = scalar_select %p350, %s32, 1
        %p352 = scmp.lt.s32.totalorder %s33, 0
        %s353 = scalar_select %p352, %s33, 0
        %s354 = sadd.s32 %s353, %s351
        %s355 = smul.addr %s354, 4
        %s356 = scalar_lea.vmem %s1, %s355
        %p357 = scmp.lt.s32.totalorder %s32, 1
        %s358 = scalar_select %p357, %s32, 1
        %s359 = smul.addr %s358, 4
        %s360 = scalar_lea.vmem %s2, %s359
        %p361 = scmp.lt.s32.totalorder %s34, 3
        %s362 = scalar_select %p361, %s34, 3
        %s363 = smul.addr %s362, 4
        %s364 = smul.addr %s363, 4
        %s365 = scalar_lea.vmem %s3, %s364
        %p366 = scmp.lt.s32.totalorder %s34, 3
        %s367 = scalar_select %p366, %s34, 3
        %s368 = smul.addr %s367, 4
        %s369 = smul.addr %s368, 4
        %s370 = scalar_lea.vmem %s4, %s369
        %p371 = scmp.lt.s32.totalorder %s34, 3
        %s372 = scalar_select %p371, %s34, 3
        %s373 = smul.addr %s372, 4
        %s374 = smul.addr %s373, 4
        %s375 = scalar_lea.vmem %s5, %s374
        %p376 = scmp.lt.s32.totalorder %s34, 3
        %s377 = scalar_select %p376, %s34, 3
        %s378 = smul.addr %s377, 4
        %s379 = scalar_lea.vmem %s6, %s378
        %v381 = vld [vmem:[%s356] sm:$0xf]
        %v382 = vld [vmem:[%s360] sm:$0xf]
        %v383 = vld [vmem:[%s365] sm:$0xf]
        %v384 = vld [vmem:[%s365 + $0x4] sm:$0xf]
        %v385 = vld [vmem:[%s365 + $0x8] sm:$0xf]
        %v386 = vld [vmem:[%s365 + $0xc] sm:$0xf]
        %v387 = vld [vmem:[%s370] sm:$0xf]
        %v388 = vld [vmem:[%s370 + $0x4] sm:$0xf]
        %v389 = vld [vmem:[%s370 + $0x8] sm:$0xf]
        %v390 = vld [vmem:[%s370 + $0xc] sm:$0xf]
        %v391 = vld [vmem:[%s375] sm:$0xf]
        %v392 = vld [vmem:[%s375 + $0x4] sm:$0xf]
        %v393 = vld [vmem:[%s375 + $0x8] sm:$0xf]
        %v394 = vld [vmem:[%s375 + $0xc] sm:$0xf]
        %v395 = vld [vmem:[%s379] sm:$0xf]
        %v400 = vunpack.c.l.b16 %v383
        %v401 = vunpack.c.l.b16 %v384
        %v402 = vunpack.c.l.b16 %v385
        %v403 = vunpack.c.l.b16 %v386
        %v404 = vpack.c.b16 %v401, %v400
        %v405 = vpack.c.b16 %v403, %v402
        %vm408 = vcmask 261120
        %v410 = vsel %vm408, %v381, 0
        %412 = vmatprep.subr.bf16.mxu0 0
        %413 = vmatpush1.bf16.msra.mxu0 0
        %414 = vmatprep.subr.bf16.mxu0 0
        %415 = vmatpush1.bf16.msra.mxu0 0
        %416 = vmatprep.subr.bf16.mxu0 0
        %417 = vmatpush1.bf16.msra.mxu0 0
        %418 = vmatprep.subr.bf16.mxu0 0
        %419 = vmatpush1.bf16.msra.mxu0 0
        %420 = vmatprep.subr.bf16.mxu0 0
        %421 = vmatpush1.bf16.msra.mxu0 0
        %422 = vmatprep.subr.bf16.mxu0 0
        %423 = vmatpush1.bf16.msra.mxu0 0
        %424 = vmatprep.subr.bf16.mxu0 0
        %425 = vmatpush1.bf16.msra.mxu0 %v405
        %426 = vmatprep.subr.bf16.mxu0 0
        %427 = vmatpush1.bf16.msra.mxu0 %v404
        %428 = vmatprep.subr.bf16.mxu0 0
        %429 = vmatpush2.bf16.msra.mxu0 0
        %430 = vmatprep.subr.bf16.mxu0 0
        %431 = vmatpush2.bf16.msra.mxu0 0
        %432 = vmatprep.subr.bf16.mxu0 0
        %433 = vmatpush2.bf16.msra.mxu0 0
        %434 = vmatprep.subr.bf16.mxu0 0
        %435 = vmatpush2.bf16.msra.mxu0 0
        %436 = vmatprep.subr.bf16.mxu0 0
        %437 = vmatpush2.bf16.msra.mxu0 0
        %438 = vmatprep.subr.bf16.mxu0 0
        %439 = vmatpush2.bf16.msra.mxu0 0
        %440 = vmatprep.subr.bf16.mxu0 0
        %441 = vmatpush2.bf16.msra.mxu0 0
        %442 = vmatprep.subr.bf16.mxu0 0
        %443 = vmatpush2.bf16.msra.mxu0 0
        %444 = vmatprep.mubr.bf16.mxu0 0
        %445 = vmatmul.mubr.bf16.gmra.mxu0 %v410
        %v446 = vpop.f32.mrf.mxu0
        %v447 = vadd.f32 0.0, %v446
        %v448 = vpop.f32.mrf.mxu0
        %v449 = vpop.f32.mrf.mxu0
        %v450 = vpop.f32.mrf.mxu0
        %451 = vdwg.mxu0
        %v456 = vunpack.c.l.b16 %v387
        %v457 = vunpack.c.l.b16 %v388
        %v458 = vunpack.c.l.b16 %v389
        %v459 = vunpack.c.l.b16 %v390
        %v460 = vpack.c.b16 %v457, %v456
        %v461 = vpack.c.b16 %v459, %v458
        %v465 = vsel %vm408, %v382, 0
        %467 = vmatprep.subr.bf16.mxu0 0
        %468 = vmatpush1.bf16.msra.mxu0 0
        %469 = vmatprep.subr.bf16.mxu0 0
        %470 = vmatpush1.bf16.msra.mxu0 0
        %471 = vmatprep.subr.bf16.mxu0 0
        %472 = vmatpush1.bf16.msra.mxu0 0
        %473 = vmatprep.subr.bf16.mxu0 0
        %474 = vmatpush1.bf16.msra.mxu0 0
        %475 = vmatprep.subr.bf16.mxu0 0
        %476 = vmatpush1.bf16.msra.mxu0 0
        %477 = vmatprep.subr.bf16.mxu0 0
        %478 = vmatpush1.bf16.msra.mxu0 0
        %479 = vmatprep.subr.bf16.mxu0 0
        %480 = vmatpush1.bf16.msra.mxu0 %v461
        %481 = vmatprep.subr.bf16.mxu0 0
        %482 = vmatpush1.bf16.msra.mxu0 %v460
        %483 = vmatprep.subr.bf16.mxu0 0
        %484 = vmatpush2.bf16.msra.mxu0 0
        %485 = vmatprep.subr.bf16.mxu0 0
        %486 = vmatpush2.bf16.msra.mxu0 0
        %487 = vmatprep.subr.bf16.mxu0 0
        %488 = vmatpush2.bf16.msra.mxu0 0
        %489 = vmatprep.subr.bf16.mxu0 0
        %490 = vmatpush2.bf16.msra.mxu0 0
        %491 = vmatprep.subr.bf16.mxu0 0
        %492 = vmatpush2.bf16.msra.mxu0 0
        %493 = vmatprep.subr.bf16.mxu0 0
        %494 = vmatpush2.bf16.msra.mxu0 0
        %495 = vmatprep.subr.bf16.mxu0 0
        %496 = vmatpush2.bf16.msra.mxu0 0
        %497 = vmatprep.subr.bf16.mxu0 0
        %498 = vmatpush2.bf16.msra.mxu0 0
        %499 = vmatprep.mubr.bf16.mxu0 0
        %500 = vmatmul.mubr.bf16.gmra.mxu0 %v465
        %v501 = vpop.f32.mrf.mxu0
        %v502 = vadd.f32 0.0, %v501
        %v503 = vpop.f32.mrf.mxu0
        %v504 = vpop.f32.mrf.mxu0
        %v505 = vpop.f32.mrf.mxu0
        %506 = vdwg.mxu0
        %v511 = vunpack.c.l.b16 %v391
        %v512 = vunpack.c.l.b16 %v392
        %v513 = vunpack.c.l.b16 %v393
        %v514 = vunpack.c.l.b16 %v394
        %v515 = vpack.c.b16 %v512, %v511
        %v516 = vpack.c.b16 %v514, %v513
        %519 = vmatprep.subr.bf16.mxu0 0
        %520 = vmatpush1.bf16.msra.mxu0 0
        %521 = vmatprep.subr.bf16.mxu0 0
        %522 = vmatpush1.bf16.msra.mxu0 0
        %523 = vmatprep.subr.bf16.mxu0 0
        %524 = vmatpush1.bf16.msra.mxu0 0
        %525 = vmatprep.subr.bf16.mxu0 0
        %526 = vmatpush1.bf16.msra.mxu0 0
        %527 = vmatprep.subr.bf16.mxu0 0
        %528 = vmatpush1.bf16.msra.mxu0 0
        %529 = vmatprep.subr.bf16.mxu0 0
        %530 = vmatpush1.bf16.msra.mxu0 0
        %531 = vmatprep.subr.bf16.mxu0 0
        %532 = vmatpush1.bf16.msra.mxu0 %v516
        %533 = vmatprep.subr.bf16.mxu0 0
        %534 = vmatpush1.bf16.msra.mxu0 %v515
        %535 = vmatprep.subr.bf16.mxu0 0
        %536 = vmatpush2.bf16.msra.mxu0 0
        %537 = vmatprep.subr.bf16.mxu0 0
        %538 = vmatpush2.bf16.msra.mxu0 0
        %539 = vmatprep.subr.bf16.mxu0 0
        %540 = vmatpush2.bf16.msra.mxu0 0
        %541 = vmatprep.subr.bf16.mxu0 0
        %542 = vmatpush2.bf16.msra.mxu0 0
        %543 = vmatprep.subr.bf16.mxu0 0
        %544 = vmatpush2.bf16.msra.mxu0 0
        %545 = vmatprep.subr.bf16.mxu0 0
        %546 = vmatpush2.bf16.msra.mxu0 0
        %547 = vmatprep.subr.bf16.mxu0 0
        %548 = vmatpush2.bf16.msra.mxu0 0
        %549 = vmatprep.subr.bf16.mxu0 0
        %550 = vmatpush2.bf16.msra.mxu0 0
        %551 = vmatprep.mubr.bf16.mxu0 0
        %552 = vmatmul.mubr.bf16.gmra.mxu0 %v465
        %v553 = vpop.f32.mrf.mxu0
        %v554 = vadd.f32 0.0, %v553
        %v555 = vpop.f32.mrf.mxu0
        %v556 = vpop.f32.mrf.mxu0
        %v557 = vpop.f32.mrf.mxu0
        %558 = vdwg.mxu0
        %v559 = vpack.c.bf16 %v447, %v447
        %v560 = vpack.c.bf16 %v502, %v502
        %v561 = vlaneseq
        %v562 = vshrl.u32 %v561, 7
        %s563 = smul.u32 %s33, 8
        %v564 = vstv %s563
        %v565 = vadd.s32 %v562, %v564
        %v566 = vlaneseq
        %v567 = vand.u32 %v566, 127
        %v568 = vsub.s32 %v565, %v567
        %v569 = vcvt.s32.f32 %v568
        %vm570 = vcmp.gt.s32.totalorder %v568, 0
        %v571 = vsel %vm570, -0.5, 2.0
        %v572 = vmul.f32 %v569, %v571
        %s573 = sld [smem:[#allocation4 + %s34]]
        %v574 = vstv %s573
        %v575 = vmul.f32 %v574, %v572
        %vm576 = vcmask 64512
        %v578 = vsel %vm576, %v559, 0
        %v581 = vsel %vm576, %v560, 0
        %583 = vmatprep.subr.bf16.mxu0 0
        %584 = vmatpush1.bf16.xpose.msra.mxu0 0
        %585 = vmatprep.subr.bf16.mxu0 0
        %586 = vmatpush1.bf16.xpose.msra.mxu0 0
        %587 = vmatprep.subr.bf16.mxu0 0
        %588 = vmatpush1.bf16.xpose.msra.mxu0 0
        %589 = vmatprep.subr.bf16.mxu0 0
        %590 = vmatpush1.bf16.xpose.msra.mxu0 0
        %591 = vmatprep.subr.bf16.mxu0 0
        %592 = vmatpush1.bf16.xpose.msra.mxu0 0
        %593 = vmatprep.subr.bf16.mxu0 0
        %594 = vmatpush1.bf16.xpose.msra.mxu0 0
        %595 = vmatprep.subr.bf16.mxu0 0
        %596 = vmatpush1.bf16.xpose.msra.mxu0 0
        %597 = vmatprep.subr.bf16.mxu0 0
        %598 = vmatpush1.bf16.xpose.msra.mxu0 %v581
        %599 = vmatprep.subr.bf16.mxu0 0
        %600 = vmatpush2.bf16.xpose.msra.mxu0 0
        %601 = vmatprep.subr.bf16.mxu0 0
        %602 = vmatpush2.bf16.xpose.msra.mxu0 0
        %603 = vmatprep.subr.bf16.mxu0 0
        %604 = vmatpush2.bf16.xpose.msra.mxu0 0
        %605 = vmatprep.subr.bf16.mxu0 0
        %606 = vmatpush2.bf16.xpose.msra.mxu0 0
        %607 = vmatprep.subr.bf16.mxu0 0
        %608 = vmatpush2.bf16.xpose.msra.mxu0 0
        %609 = vmatprep.subr.bf16.mxu0 0
        %610 = vmatpush2.bf16.xpose.msra.mxu0 0
        %611 = vmatprep.subr.bf16.mxu0 0
        %612 = vmatpush2.bf16.xpose.msra.mxu0 0
        %613 = vmatprep.subr.bf16.mxu0 0
        %614 = vmatpush2.bf16.xpose.msra.mxu0 0
        %615 = vmatprep.mubr.bf16.mxu0 0
        %616 = vmatmul.mubr.bf16.gmra.mxu0 %v578
        %v617 = vpop.f32.mrf.mxu0
        %v618 = vadd.f32 %v575, %v617
        %v619 = vpop.f32.mrf.mxu0
        %v620 = vpop.f32.mrf.mxu0
        %v621 = vpop.f32.mrf.mxu0
        %622 = vdwg.mxu0
        %v623 = vsel %vm576, %v618, -inf
        %624 = vmax.xlane.f32.xlu0 %v623
        %v625 = vpop.xlane.xlu0 %624
        %v626 = vsub.f32 %v618, %v625
        %v627 = vmul.f32 %v626, 1.442695
        %v628 = vpow.pop %v627
        %v629 = vsel %vm576, %v628, 0.0
        %630 = vadd.xlane.f32.xlu0 %v629
        %v631 = vpop.xlane.xlu0 %630
        %v632 = vrcp.pop %v631
        %v633 = vmul.f32 %v628, %v632
        %v634 = vpack.c.bf16 %v633, %v633
        %v635 = vpack.c.bf16 %v554, %v554
        %v637 = vsel %vm576, %v634, 0
        %vm639 = vcmask 1043456
        %v641 = vsel %vm639, %v635, 0
        %643 = vmatprep.subr.bf16.mxu0 0
        %644 = vmatpush1.bf16.msra.mxu0 0
        %645 = vmatprep.subr.bf16.mxu0 0
        %646 = vmatpush1.bf16.msra.mxu0 0
        %647 = vmatprep.subr.bf16.mxu0 0
        %648 = vmatpush1.bf16.msra.mxu0 0
        %649 = vmatprep.subr.bf16.mxu0 0
        %650 = vmatpush1.bf16.msra.mxu0 0
        %651 = vmatprep.subr.bf16.mxu0 0
        %652 = vmatpush1.bf16.msra.mxu0 0
        %653 = vmatprep.subr.bf16.mxu0 0
        %654 = vmatpush1.bf16.msra.mxu0 0
        %655 = vmatprep.subr.bf16.mxu0 0
        %656 = vmatpush1.bf16.msra.mxu0 0
        %657 = vmatprep.subr.bf16.mxu0 0
        %658 = vmatpush1.bf16.msra.mxu0 %v641
        %659 = vmatprep.subr.bf16.mxu0 0
        %660 = vmatpush2.bf16.msra.mxu0 0
        %661 = vmatprep.subr.bf16.mxu0 0
        %662 = vmatpush2.bf16.msra.mxu0 0
        %663 = vmatprep.subr.bf16.mxu0 0
        %664 = vmatpush2.bf16.msra.mxu0 0
        %665 = vmatprep.subr.bf16.mxu0 0
        %666 = vmatpush2.bf16.msra.mxu0 0
        %667 = vmatprep.subr.bf16.mxu0 0
        %668 = vmatpush2.bf16.msra.mxu0 0
        %669 = vmatprep.subr.bf16.mxu0 0
        %670 = vmatpush2.bf16.msra.mxu0 0
        %671 = vmatprep.subr.bf16.mxu0 0
        %672 = vmatpush2.bf16.msra.mxu0 0
        %673 = vmatprep.subr.bf16.mxu0 0
        %674 = vmatpush2.bf16.msra.mxu0 0
        %675 = vmatprep.mubr.bf16.mxu0 0
        %676 = vmatmul.mubr.bf16.gmra.mxu0 %v637
        %v677 = vpop.f32.mrf.mxu0
        %v678 = vadd.f32 0.0, %v677
        %v679 = vpop.f32.mrf.mxu0
        %v680 = vpop.f32.mrf.mxu0
        %v681 = vpop.f32.mrf.mxu0
        %682 = vdwg.mxu0
        %v683 = vpack.c.bf16 %v678, %v678
        %v685 = vsel %vm576, %v683, 0
        %v688 = vsel %vm639, %v395, 0
        %690 = vmatprep.subr.bf16.mxu0 0
        %691 = vmatpush1.bf16.msra.mxu0 0
        %692 = vmatprep.subr.bf16.mxu0 0
        %693 = vmatpush1.bf16.msra.mxu0 0
        %694 = vmatprep.subr.bf16.mxu0 0
        %695 = vmatpush1.bf16.msra.mxu0 0
        %696 = vmatprep.subr.bf16.mxu0 0
        %697 = vmatpush1.bf16.msra.mxu0 0
        %698 = vmatprep.subr.bf16.mxu0 0
        %699 = vmatpush1.bf16.msra.mxu0 0
        %700 = vmatprep.subr.bf16.mxu0 0
        %701 = vmatpush1.bf16.msra.mxu0 0
        %702 = vmatprep.subr.bf16.mxu0 0
        %703 = vmatpush1.bf16.msra.mxu0 0
        %704 = vmatprep.subr.bf16.mxu0 0
        %705 = vmatpush1.bf16.msra.mxu0 %v688
        %706 = vmatprep.subr.bf16.mxu0 0
        %707 = vmatpush2.bf16.msra.mxu0 0
        %708 = vmatprep.subr.bf16.mxu0 0
        %709 = vmatpush2.bf16.msra.mxu0 0
        %710 = vmatprep.subr.bf16.mxu0 0
        %711 = vmatpush2.bf16.msra.mxu0 0
        %712 = vmatprep.subr.bf16.mxu0 0
        %713 = vmatpush2.bf16.msra.mxu0 0
        %714 = vmatprep.subr.bf16.mxu0 0
        %715 = vmatpush2.bf16.msra.mxu0 0
        %716 = vmatprep.subr.bf16.mxu0 0
        %717 = vmatpush2.bf16.msra.mxu0 0
        %718 = vmatprep.subr.bf16.mxu0 0
        %719 = vmatpush2.bf16.msra.mxu0 0
        %720 = vmatprep.subr.bf16.mxu0 0
        %721 = vmatpush2.bf16.msra.mxu0 0
        %722 = vmatprep.mubr.bf16.mxu0 0
        %723 = vmatmul.mubr.bf16.gmra.mxu0 %v685
        %v724 = vpop.f32.mrf.mxu0
        %v725 = vadd.f32 0.0, %v724
        %v726 = vpop.f32.mrf.mxu0
        %v727 = vpop.f32.mrf.mxu0
        %v728 = vpop.f32.mrf.mxu0
        %729 = vdwg.mxu0
        %p730 = scmp.eq.s32.totalorder %s34, 0
        // Predicated region
        $region45: #{tpu_custom_call.1} parent=43 // pred_check
          %p731 = pneg %p730
        $region46: #{tpu_custom_call.1} parent=43 // pred_check_branch
          %733 = sbr.rel (%p731) target = $region48
        $region47: #{tpu_custom_call.1} parent=43 // pred_region
          %734 = vst.msk [vmem:[#allocation2] sm:$0xff] %vm408, 0.0
        $region48: #{tpu_custom_call.1} parent=43 // pred_fallthru
          _
        %v735 = vld [vmem:[#allocation2] sm:$0xff]
        %v736 = vadd.f32 %v735, %v725
        %737 = vst.msk [vmem:[#allocation2] sm:$0xff] %vm408, %v736
        %p738 = scmp.eq.s32.totalorder %s34, 3
        // Predicated region
        $region49: #{tpu_custom_call.1} parent=43 // pred_check
          %p739 = pneg %p738
        $region50: #{tpu_custom_call.1} parent=43 // pred_check_branch
          %741 = sbr.rel (%p739) target = $region52
        $region51: #{tpu_custom_call.1} parent=43 // pred_region
          %v742 = vld [vmem:[#allocation2] sm:$0xff]
          %743 = vst.msk [vmem:[%s349] sm:$0xff] %vm408, %v742
        $region52: #{tpu_custom_call.1} parent=43 // pred_fallthru
          _
        %s744 = sand.u32 %s214, 1
        %s745 = scalar_lea.sflag [#allocation6], %s744
        %s746 = sand.u32 %s214, 1
        %s747 = smul.addr %s746, 8
        %s748 = scalar_lea.vmem [#allocation5], %s747
        // Predicated region
        $region53: #{tpu_custom_call.1} parent=43 // pred_check
          %p749 = pneg %p224
        $region54: #{tpu_custom_call.1} parent=43 // pred_check_branch
          %751 = sbr.rel (%p749) target = $region56
        $region55: #{tpu_custom_call.1} parent=43 // pred_region
          %s753 = ssub.s32 128, 128
          %754 = vsyncadd %s745, %s753
          %s755 = sadd.s32 %s33, %s32
          %s756 = smul.addr %s755, 128
          %s757 = scalar_lea.hbm %s7, %s756
          %s759 = sshll.u32 %s748, 4
          %s760 = int_to_ptr.vmem [resolvable:$true] %s759
          %762 = dma.vmem_to_hbm [thread:$0]  %s760, 128, %s757, %s745
        $region56: #{tpu_custom_call.1} parent=43 // pred_fallthru
          _
      $region44: #{tpu_custom_call.1} parent=5 // pred_fallthru
        _
      %p763 = scmp.le.s32.totalorder 2, %s22
      // Predicated region
      $region57: #{tpu_custom_call.1} parent=5 // pred_check
        %p764 = pneg %p763
      $region58: #{tpu_custom_call.1} parent=5 // pred_check_branch
        %766 = sbr.rel (%p764) target = $region60
      $region59: #{tpu_custom_call.1} parent=5 // pred_region
        %s767 = ssub.s32 %s22, 2
        // Predicated region
        $region61: #{tpu_custom_call.1} parent=59 // pred_check
          %p768 = pneg %p230
        $region62: #{tpu_custom_call.1} parent=59 // pred_check_branch
          %770 = sbr.rel (%p768) target = $region64
        $region63: #{tpu_custom_call.1} parent=59 // pred_region
          %s771 = sand.u32 %s215, 1
          %s772 = scalar_lea.sflag [#allocation6], %s771
          %s773 = sand.u32 %s215, 1
          %s774 = smul.addr %s773, 8
          %s775 = scalar_lea.vmem [#allocation5], %s774
          %776 = dma.done %s772, 128
        $region64: #{tpu_custom_call.1} parent=59 // pred_fallthru
          _
      $region60: #{tpu_custom_call.1} parent=5 // pred_fallthru
        _
    $region6: #{tpu_custom_call.1} parent=1 // loop_footer
      %s26 = sadd.s32 1, %s22
    $region7: #{tpu_custom_call.1} parent=1 // loop_footer_branch
      %21 = sbr.rel target = $region3
    $region8: #{tpu_custom_call.1} parent=1 // loop_exit
      _
    %777 = vsyncpa [#allocation6], 1
    %s778 = scalar_lea.sflag [#allocation6], 1
    %779 = vsyncpa %s778, 1

</llo_original>
